<compile_context>
chip_gen: v7x
topology: tpu7x:2x2x1
jax: 0.10.0
libtpu: 0.0.40
codegen_flags: <defaults>
</compile_context>

<pallas_src>
import functools

import jax
import jax.numpy as jnp
from jax.experimental import pallas as pl
from jax.experimental.pallas import tpu as pltpu


def _round_up(n: int, m: int) -> int:
    return ((n + m - 1) // m) * m


def _choose_row_tile(bc: int, hw: int,
                     target_block_bytes: int = 4 << 20,
                     max_rows: int = 1024) -> int:
    """Rows per block: aim for ~4 MiB (f32) blocks, multiple of 8 sublanes.

    With input + output double-buffered this keeps the pipelined footprint
    well under the 48 MiB scoped VMEM limit we set (and under v7x's 64 MiB
    physical VMEM), while being large enough that per-grid-step overhead is
    negligible.
    """
    rows = max(target_block_bytes // max(hw * 4, 1), 8)
    rows = min(rows, max_rows)
    rows = max((rows // 8) * 8, 8)
    # never tile wider than the (sublane-padded) data itself
    rows = min(rows, _round_up(bc, 8))
    return rows


def _simam_kernel(x_ref, o_ref, *, epsilon: float, hw: int):
    # x_ref / o_ref: (row_tile, H*W) tile in VMEM; one row == one (b, c) map.
    x = x_ref[...].astype(jnp.float32)

    # num_elements = w*h - 1, matching PyTorch exactly (hw == 1 gives the same
    # divide-by-zero / inf-gate behaviour as the torch module).
    num_elements = float(hw - 1)
    inv_hw = 1.0 / float(hw)

    # Fused single-pass moments: sum(x) and sum(x*x) in one traversal; the
    # sum of mean-centered squares is s2 - s1*mean (f32 accumulation).
    s1 = jnp.sum(x, axis=-1, keepdims=True)
    s2 = jnp.sum(x * x, axis=-1, keepdims=True)
    mean = s1 * inv_hw
    sum_mcs = jnp.maximum(s2 - s1 * mean, 0.0)  # clamp tiny negative rounding

    denom = 4.0 * (sum_mcs / num_elements + epsilon) + 0.5
    # Per-row (rt, 1) reciprocal instead of a full-tile divide; exact variant
    # so the numerics stay within the tight self-test tolerance.
    inv_denom = pl.reciprocal(denom, approx=False)

    xc = x - mean
    response = (xc * xc) * inv_denom
    out = x * jax.nn.sigmoid(response)
    o_ref[...] = out.astype(o_ref.dtype)


def simam_block(x: jax.Array,
                epsilon: float = 1e-4,
                row_tile: int | None = None,
                vmem_limit_bytes: int = 48 << 20) -> jax.Array:
    """SIMAMBlock.forward for NCHW input x of shape (B, C, H, W)."""
    b, c, h, w = x.shape
    bc = b * c
    hw = h * w
    dtype_bytes = jnp.dtype(x.dtype).itemsize

    x2d = x.reshape(bc, hw)

    rt = row_tile if row_tile is not None else _choose_row_tile(bc, hw)
    rt = max(_round_up(rt, 8), 8)  # sublane-aligned leading block dim

    # Ragged last block (bc % rt != 0) is handled by Pallas: partial reads are
    # allowed (rows are independent, garbage rows compute harmless values) and
    # out-of-bounds writes are masked.  No host-side padding copy needed.
    grid = (pl.cdiv(bc, rt),)

    kernel = functools.partial(_simam_kernel, epsilon=epsilon, hw=hw)

    cost = pl.CostEstimate(
        flops=8 * bc * hw,
        transcendentals=bc * hw,
        bytes_accessed=2 * bc * hw * dtype_bytes,
    )

    # Note: the block's last dim equals the full array last dim (hw), so
    # non-multiple-of-128 spatial sizes are still legal (masked stores).
    out2d = pl.pallas_call(
        kernel,
        out_shape=jax.ShapeDtypeStruct((bc, hw), x.dtype),
        grid_spec=pltpu.PrefetchScalarGridSpec(
            num_scalar_prefetch=0,
            grid=grid,
            in_specs=[pl.BlockSpec((rt, hw), lambda i: (i, 0))],
            out_specs=pl.BlockSpec((rt, hw), lambda i: (i, 0)),
        ),
        compiler_params=pltpu.CompilerParams(
            dimension_semantics=("parallel",),
            vmem_limit_bytes=vmem_limit_bytes,
        ),
        cost_estimate=cost,
    )(x2d)

    return out2d.reshape(b, c, h, w)


def _simam_ref(x, epsilon=1e-4):
    # pure-JAX reference mirroring the PyTorch forward
    b, c, h, w = x.shape
    num_elements = w * h - 1
    xf = x.astype(jnp.float32)
    mcs = (xf - jnp.mean(xf, axis=(2, 3), keepdims=True)) ** 2
    denom = 4.0 * (jnp.sum(mcs, axis=(2, 3), keepdims=True) / num_elements + epsilon) + 0.5
    resp = mcs / denom
    return (xf * jax.nn.sigmoid(resp)).astype(x.dtype)


if __name__ == "__main__":
    key = jax.random.PRNGKey(0)
    x = jax.random.normal(key, (2, 4, 16, 16), dtype=jnp.float32)

    out = simam_block(x, epsilon=1e-4)
    out = jax.block_until_ready(out)

    ref = _simam_ref(x, epsilon=1e-4)
    assert out.shape == x.shape and out.dtype == x.dtype
    assert jnp.allclose(out, ref, atol=2e-5, rtol=2e-5), "mismatch vs reference"

    # also exercise the ragged-last-block path (B*C not a multiple of 8)
    x2 = jax.random.normal(jax.random.PRNGKey(1), (3, 3, 14, 14), dtype=jnp.float32)
    out2 = jax.block_until_ready(simam_block(x2))
    assert jnp.allclose(out2, _simam_ref(x2), atol=2e-5, rtol=2e-5), "mismatch (ragged)"

    print("KERNEL_OK")
</pallas_src>

<mosaic_0001>
module attributes {stable_mosaic.version = 11 : i64} {
  func.func @_simam_kernel(%arg0: i32, %arg1: memref<8x256xf32, #tpu.memory_space<vmem>>, %arg2: memref<8x256xf32, #tpu.memory_space<vmem>>) attributes {dimension_semantics = [#tpu.dimension_semantics<parallel>], iteration_bounds = array<i64: 1>, scalar_prefetch = 0 : i64, scratch_operands = 0 : i64, tpu.core_type = #tpu.core_type<tc>, window_params = [{transform_indices = @transform_0, window_bounds = array<i64: 8, 256>}, {transform_indices = @transform_1, window_bounds = array<i64: 8, 256>}]} {
    %c0 = arith.constant 0 : index
    %c0_0 = arith.constant 0 : index
    %0 = vector.load %arg1[%c0, %c0_0] : memref<8x256xf32, #tpu.memory_space<vmem>>, vector<8x256xf32>
    %cst = arith.constant dense<0.000000e+00> : vector<8xf32>
    %1 = vector.multi_reduction <add>, %0, %cst [1] : vector<8x256xf32> to vector<8xf32>
    %2 = vector.shape_cast %1 : vector<8xf32> to vector<8x1xf32>
    %3 = arith.mulf %0, %0 : vector<8x256xf32>
    %cst_1 = arith.constant dense<0.000000e+00> : vector<8xf32>
    %4 = vector.multi_reduction <add>, %3, %cst_1 [1] : vector<8x256xf32> to vector<8xf32>
    %5 = vector.shape_cast %4 : vector<8xf32> to vector<8x1xf32>
    %cst_2 = arith.constant 3.906250e-03 : f32
    %6 = vector.broadcast %cst_2 : f32 to vector<8x1xf32>
    %7 = arith.mulf %2, %6 : vector<8x1xf32>
    %8 = arith.mulf %2, %7 : vector<8x1xf32>
    %9 = arith.subf %5, %8 : vector<8x1xf32>
    %cst_3 = arith.constant 0.000000e+00 : f32
    %10 = vector.broadcast %cst_3 : f32 to vector<8x1xf32>
    %11 = arith.maximumf %9, %10 : vector<8x1xf32>
    %cst_4 = arith.constant 2.550000e+02 : f32
    %12 = vector.broadcast %cst_4 : f32 to vector<8x1xf32>
    %13 = arith.divf %11, %12 : vector<8x1xf32>
    %cst_5 = arith.constant 9.99999974E-5 : f32
    %14 = vector.broadcast %cst_5 : f32 to vector<8x1xf32>
    %15 = arith.addf %13, %14 : vector<8x1xf32>
    %cst_6 = arith.constant 4.000000e+00 : f32
    %16 = vector.broadcast %cst_6 : f32 to vector<8x1xf32>
    %17 = arith.mulf %16, %15 : vector<8x1xf32>
    %cst_7 = arith.constant 5.000000e-01 : f32
    %18 = vector.broadcast %cst_7 : f32 to vector<8x1xf32>
    %19 = arith.addf %17, %18 : vector<8x1xf32>
    %20 = tpu.reciprocal %19 : vector<8x1xf32> -> vector<8x1xf32>
    %21 = vector.broadcast %7 : vector<8x1xf32> to vector<8x256xf32>
    %22 = arith.subf %0, %21 : vector<8x256xf32>
    %23 = arith.mulf %22, %22 : vector<8x256xf32>
    %24 = vector.broadcast %20 : vector<8x1xf32> to vector<8x256xf32>
    %25 = arith.mulf %23, %24 : vector<8x256xf32>
    %26 = arith.negf %25 : vector<8x256xf32>
    %27 = math.exp %26 : vector<8x256xf32>
    %cst_8 = arith.constant 1.000000e+00 : f32
    %28 = vector.broadcast %cst_8 : f32 to vector<8x256xf32>
    %29 = arith.addf %28, %27 : vector<8x256xf32>
    %30 = arith.divf %28, %29 : vector<8x256xf32>
    %31 = arith.mulf %0, %30 : vector<8x256xf32>
    %c0_9 = arith.constant 0 : index
    %c0_10 = arith.constant 0 : index
    %32 = vector.load %arg2[%c0_9, %c0_10] : memref<8x256xf32, #tpu.memory_space<vmem>>, vector<8x256xf32>
    tpu.vector_store %arg2[%c0_9, %c0_10], %31 {strides = array<i32>} : memref<8x256xf32, #tpu.memory_space<vmem>>, vector<8x256xf32>,
    return
  }
  func.func @transform_0(%arg0: i32) -> (i32, i32) {
    %c0_i32 = arith.constant 0 : i32
    %c0_i32_0 = arith.constant 0 : i32
    return %arg0, %c0_i32 : i32, i32
  }
  func.func @transform_1(%arg0: i32) -> (i32, i32) {
    %c0_i32 = arith.constant 0 : i32
    %c0_i32_0 = arith.constant 0 : i32
    return %arg0, %c0_i32 : i32, i32
  }
}

</mosaic_0001>

<llo_original>
// kernel: tpu_custom_call.1
$region0: #{tpu_custom_call.1}
  #allocation0 [shape = 'u32[]', space=smem, size = 0x4, offset = 0x4, fixed_abs, tag = 'smem constant byte address 0x4 - core index']
  #allocation1 [shape = 'u32[144,128]{1,0:T(1,128)}', space=vmem, size = 0x12000, scoped, tag = 'internal scratch']
  %s0 = inlined_call_operand.hbm [shape: f32[8,256], index: 0, kind: input, shape index: {}]
  %s1 = inlined_call_operand.hbm [shape: f32[8,256], index: 1, kind: output, shape index: {}]
  %s2 = sld [smem:[#allocation0]]
  $region18: #{tpu_custom_call.1} parent=0
    _
  %s4 = ssub.s32 1, %s2
  %s5 = scalar_select 0, %s4, %s2
  $region1: #{tpu_custom_call.1} parent=0
    #allocation2 [shape = 'u8[8192]{0}', space=vmem, size = 0x2000, scoped, tag = 'input window, operand 0, single buffered']
    #allocation3 [shape = 's32[1]{0}', space=sflag, size = 0x4, scoped, tag = 'scoped memory for tpu_custom_call.1']
    #allocation4 [shape = 's32[1]{0}', space=sflag, size = 0x4, scoped, tag = 'scoped memory for tpu_custom_call.1']
    #allocation5 [shape = 'u8[8192]{0}', space=vmem, size = 0x2000, scoped, tag = 'output window, operand 0, single buffered']
    %6 = vsyncpa [#allocation3], 0
    %7 = vsyncpa [#allocation4], 0
    // Predicated region
    $region2: #{tpu_custom_call.1} parent=1 // pred_check
      _
    $region3: #{tpu_custom_call.1} parent=1 // pred_check_branch
      %9 = sbr.rel (0) target = $region5
    $region4: #{tpu_custom_call.1} parent=1 // pred_region
      %s11 = ssub.s32 256, 256
      %12 = vsyncadd [#allocation3], %s11
      %s14 = sshll.u32 [#allocation2], 4
      %s15 = int_to_ptr.vmem [resolvable:$true] %s14
      %17 = dma.hbm_to_vmem [thread:$0]  %s0, 256, %s15, [#allocation3]
    $region5: #{tpu_custom_call.1} parent=1 // pred_fallthru
      _
    // Predicated region
    $region6: #{tpu_custom_call.1} parent=1 // pred_check
      _
    $region7: #{tpu_custom_call.1} parent=1 // pred_check_branch
      %19 = sbr.rel (0) target = $region9
    $region8: #{tpu_custom_call.1} parent=1 // pred_region
      %20 = dma.done [#allocation3], 256
    $region9: #{tpu_custom_call.1} parent=1 // pred_fallthru
      _
    %v21 = vld [vmem:[#allocation2] sm:$0xff]
    %v22 = vld [vmem:[#allocation2 + $0x8] sm:$0xff]
    %v23 = vadd.f32 %v21, %v22
    %24 = vadd.xlane.f32.xlu0 %v23
    %v25 = vpop.xlane.xlu0 %24
    %v26 = vmul.f32 %v21, %v21
    %v27 = vmul.f32 %v22, %v22
    %v28 = vadd.f32 %v26, %v27
    %29 = vadd.xlane.f32.xlu0 %v28
    %v30 = vpop.xlane.xlu0 %29
    %v31 = vmul.f32 %v25, 0.00390625
    %v32 = vmul.f32 %v25, %v31
    %v33 = vsub.f32 %v30, %v32
    %v34 = vmax.f32 %v33, 0.0
    %v35 = vrcp.pop 255.0
    %v36 = vmul.f32 %v34, %v35
    %v37 = vadd.f32 %v36, 0.0001
    %v38 = vmul.f32 %v37, 4.0
    %v39 = vadd.f32 %v38, 0.5
    %v40 = vrcp.pop %v39
    %v41 = vsub.f32 %v21, %v31
    %v42 = vsub.f32 %v22, %v31
    %v43 = vmul.f32 %v41, %v41
    %v44 = vmul.f32 %v42, %v42
    %v45 = vmul.f32 %v43, %v40
    %v46 = vmul.f32 %v44, %v40
    %v47 = vxor.u32 %v45, 2147483648
    %v48 = vxor.u32 %v46, 2147483648
    %v49 = vmul.f32 %v47, 1.442695
    %v50 = vpow.pop %v49
    %v51 = vmul.f32 %v48, 1.442695
    %v52 = vpow.pop %v51
    %v53 = vadd.f32 %v50, 1.0
    %v54 = vadd.f32 %v52, 1.0
    %v55 = vrcp.pop %v53
    %v56 = vmul.f32 1.0, %v55
    %v57 = vrcp.pop %v54
    %v58 = vmul.f32 1.0, %v57
    %v59 = vmul.f32 %v21, %v56
    %v60 = vmul.f32 %v22, %v58
    %61 = vst [vmem:[#allocation5] sm:$0xff] %v59
    %62 = vst [vmem:[#allocation5 + $0x8] sm:$0xff] %v60
    // Predicated region
    $region10: #{tpu_custom_call.1} parent=1 // pred_check
      _
    $region11: #{tpu_custom_call.1} parent=1 // pred_check_branch
      %64 = sbr.rel (0) target = $region13
    $region12: #{tpu_custom_call.1} parent=1 // pred_region
      %s66 = ssub.s32 256, 256
      %67 = vsyncadd [#allocation4], %s66
      %s69 = sshll.u32 [#allocation5], 4
      %s70 = int_to_ptr.vmem [resolvable:$true] %s69
      %72 = dma.vmem_to_hbm [thread:$0]  %s70, 256, %s1, [#allocation4]
    $region13: #{tpu_custom_call.1} parent=1 // pred_fallthru
      _
    // Predicated region
    $region14: #{tpu_custom_call.1} parent=1 // pred_check
      _
    $region15: #{tpu_custom_call.1} parent=1 // pred_check_branch
      %74 = sbr.rel (0) target = $region17
    $region16: #{tpu_custom_call.1} parent=1 // pred_region
      %75 = dma.done [#allocation4], 256
    $region17: #{tpu_custom_call.1} parent=1 // pred_fallthru
      _
    %76 = vsyncpa [#allocation3], 1
    %77 = vsyncpa [#allocation4], 1

</llo_original>
